<compile_context>
chip_gen: v7x
topology: tpu7x:2x2x1
jax: 0.10.0
libtpu: 0.0.40
codegen_flags: <defaults>
</compile_context>

<pallas_src>
import math

import jax
import jax.numpy as jnp
from jax import lax
from jax.experimental import pallas as pl
from jax.experimental.pallas import tpu as pltpu


_NEG_BIAS = -1e9            # matches torch masked_fill(-1e9)
_MXU_DTYPE = jnp.bfloat16   # MXU operand dtype; accumulation is always f32


def _round_up(x, m):
    return ((x + m - 1) // m) * m


def _vmem_budget_bytes():
    """Generation-aware VMEM budget (v5e/v6e: 128 MiB, v7x: 64 MiB per TC)."""
    cap = 64 * 1024 * 1024
    try:
        info = pltpu.get_tpu_info()
        cap = int(getattr(info, "vmem_capacity_bytes", cap)) or cap
    except Exception:
        pass
    # Headroom for double-buffered input blocks + compiler [tq,tk] temporaries.
    return min(int(cap * 0.6), 96 * 1024 * 1024)


# ---------------------------------------------------------------------------
# Kernel 1: K / V projection, done once over the key/value sequence.
# ---------------------------------------------------------------------------
def _kv_projection_kernel(k_ref, v_ref, wk_ref, bk_ref, wv_ref, bv_ref,
                          ko_ref, vo_ref):
    k_in = k_ref[0].astype(_MXU_DTYPE)
    v_in = v_ref[0].astype(_MXU_DTYPE)
    ko_ref[0] = (jnp.dot(k_in, wk_ref[...], preferred_element_type=jnp.float32)
                 + bk_ref[...]).astype(ko_ref.dtype)
    vo_ref[0] = (jnp.dot(v_in, wv_ref[...], preferred_element_type=jnp.float32)
                 + bv_ref[...]).astype(vo_ref.dtype)


# ---------------------------------------------------------------------------
# Kernel 2: flash attention (online softmax) over pre-projected K / V.
# ---------------------------------------------------------------------------
def _flash_attention_kernel(q_ref, k_ref, v_ref, bias_ref,
                            wq_ref, bq_ref,
                            o_ref,
                            qproj_sc, m_sc, l_sc, acc_sc):
    ki = pl.program_id(2)
    nk = pl.num_programs(2)

    @pl.when(ki == 0)
    def _init():
        # Project the query tile once per (batch, q-tile); 1/sqrt(D) is already
        # folded into wq/bq by the wrapper.  bf16 operands, f32 accumulation.
        qp = (jnp.dot(q_ref[0].astype(_MXU_DTYPE), wq_ref[...],
                      preferred_element_type=jnp.float32)
              + bq_ref[...])
        qproj_sc[...] = qp.astype(_MXU_DTYPE)
        m_sc[...] = jnp.full_like(m_sc, -jnp.inf)
        l_sc[...] = jnp.zeros_like(l_sc)
        acc_sc[...] = jnp.zeros_like(acc_sc)

    k = k_ref[0]                                   # [tk, D] bf16
    v = v_ref[0]                                   # [tk, D] bf16

    # Scores: contract the last axes directly (no K.T materialization).
    s = lax.dot_general(qproj_sc[...], k, (((1,), (1,)), ((), ())),
                        preferred_element_type=jnp.float32)       # [tq, tk] f32
    # Additive mask bias, broadcast over query rows.
    s = s + bias_ref[0]

    # Online softmax (flash) accumulation, all f32 (v5e-safe).
    m_prev = m_sc[...]
    m_new = jnp.maximum(m_prev, jnp.max(s, axis=-1, keepdims=True))
    alpha = jnp.exp(m_prev - m_new)
    p = jnp.exp(s - m_new)
    l_sc[...] = alpha * l_sc[...] + jnp.sum(p, axis=-1, keepdims=True)
    acc_sc[...] = alpha * acc_sc[...] + jnp.dot(
        p.astype(_MXU_DTYPE), v, preferred_element_type=jnp.float32)
    m_sc[...] = m_new

    # Dropout on attention weights: identity in eval mode.

    @pl.when(ki == nk - 1)
    def _finalize():
        l = l_sc[...]
        inv_l = pl.reciprocal(l, approx=True)      # EUP vrcp (otherwise-idle slot)
        inv_l = inv_l * (2.0 - l * inv_l)          # one Newton step -> f32 accuracy
        o_ref[0] = (acc_sc[...] * inv_l).astype(o_ref.dtype)


# ---------------------------------------------------------------------------
# Wrapper
# ---------------------------------------------------------------------------
def attention_forward(query, key, value, mask, wq, bq, wk, bk, wv, bv):
    B, S_q, H = query.shape
    Bk, S_k, Hk = key.shape
    assert (B, H) == (Bk, Hk) and value.shape == key.shape
    D = wq.shape[1]
    out_dtype = query.dtype

    budget = _vmem_budget_bytes()
    if budget >= 64 * 1024 * 1024:        # v5e / v6e (128 MiB physical VMEM)
        tq_cap, tk_cap = 512, 1024
    else:                                 # v7x (64 MiB per TensorCore)
        tq_cap, tk_cap = 256, 512

    # ---- tile selection (no divisibility requirement on S_q / S_k) ----
    if S_q <= tq_cap:
        tq = S_q
        if B == 1 and S_q >= 16:
            # Guarantee >= 2 parallel blocks so both v7x TensorCores get work.
            tq = _round_up((S_q + 1) // 2, 8)
    else:
        tq = tq_cap
    S_q_pad = _round_up(S_q, tq)

    tk = S_k if S_k <= tk_cap else tk_cap
    S_k_pad = _round_up(S_k, tk)

    # ---- trace-time parameter preprocessing (constant-folds under jit) ----
    scale = 1.0 / math.sqrt(D)
    wq_s = (wq * scale).astype(_MXU_DTYPE)           # fold 1/sqrt(D) into Q proj
    bq_s = (bq * scale).astype(jnp.float32)
    wk_c = wk.astype(_MXU_DTYPE)
    wv_c = wv.astype(_MXU_DTYPE)
    bk_c = bk.astype(jnp.float32)
    bv_c = bv.astype(jnp.float32)

    # Additive mask bias, one value per key position; padded keys get -1e9.
    if mask is None:
        bias = jnp.zeros((B, S_k), jnp.float32)
    else:
        bias = jnp.where(mask.astype(jnp.int32) == 0,
                         jnp.float32(_NEG_BIAS), jnp.float32(0.0))
    if S_k_pad != S_k:
        bias = jnp.pad(bias, ((0, 0), (0, S_k_pad - S_k)),
                       constant_values=_NEG_BIAS)
        key = jnp.pad(key, ((0, 0), (0, S_k_pad - S_k), (0, 0)))
        value = jnp.pad(value, ((0, 0), (0, S_k_pad - S_k), (0, 0)))
    bias = bias.reshape(B, 1, S_k_pad)               # layout-clean (1,1,tk) blocks

    if S_q_pad != S_q:
        query = jnp.pad(query, ((0, 0), (0, S_q_pad - S_q), (0, 0)))

    # ---- pass 1: project K and V once (bf16 outputs -> half the KV stream) ----
    nk_tiles = S_k_pad // tk
    k_proj, v_proj = pl.pallas_call(
        _kv_projection_kernel,
        out_shape=(jax.ShapeDtypeStruct((B, S_k_pad, D), _MXU_DTYPE),
                   jax.ShapeDtypeStruct((B, S_k_pad, D), _MXU_DTYPE)),
        grid_spec=pltpu.PrefetchScalarGridSpec(
            num_scalar_prefetch=0,
            grid=(B, nk_tiles),
            in_specs=[
                pl.BlockSpec((1, tk, H), lambda b, si: (b, si, 0)),
                pl.BlockSpec((1, tk, H), lambda b, si: (b, si, 0)),
                pl.BlockSpec((H, D), lambda b, si: (0, 0)),
                pl.BlockSpec((1, D), lambda b, si: (0, 0)),
                pl.BlockSpec((H, D), lambda b, si: (0, 0)),
                pl.BlockSpec((1, D), lambda b, si: (0, 0)),
            ],
            out_specs=(
                pl.BlockSpec((1, tk, D), lambda b, si: (b, si, 0)),
                pl.BlockSpec((1, tk, D), lambda b, si: (b, si, 0)),
            )),
        compiler_params=pltpu.CompilerParams(
            dimension_semantics=("parallel", "parallel"),
            vmem_limit_bytes=budget),
    )(key, value, wk_c, bk_c, wv_c, bv_c)

    # ---- pass 2: flash attention over the projected K / V ----
    grid = (B, S_q_pad // tq, nk_tiles)

    q_spec = pl.BlockSpec((1, tq, H), lambda b, qi, ki: (b, qi, 0))
    k_spec = pl.BlockSpec((1, tk, D), lambda b, qi, ki: (b, ki, 0))
    v_spec = pl.BlockSpec((1, tk, D), lambda b, qi, ki: (b, ki, 0))
    bias_spec = pl.BlockSpec((1, 1, tk), lambda b, qi, ki: (b, 0, ki))
    # Constant index maps -> weight/bias blocks stay resident in VMEM.
    wq_spec = pl.BlockSpec((H, D), lambda b, qi, ki: (0, 0))
    bq_spec = pl.BlockSpec((1, D), lambda b, qi, ki: (0, 0))
    out_spec = pl.BlockSpec((1, tq, D), lambda b, qi, ki: (b, qi, 0))

    out = pl.pallas_call(
        _flash_attention_kernel,
        out_shape=jax.ShapeDtypeStruct((B, S_q_pad, D), out_dtype),
        grid_spec=pltpu.PrefetchScalarGridSpec(
            num_scalar_prefetch=0,
            grid=grid,
            in_specs=[q_spec, k_spec, v_spec, bias_spec, wq_spec, bq_spec],
            out_specs=out_spec,
            scratch_shapes=[
                pltpu.VMEM((tq, D), _MXU_DTYPE),     # projected (scaled) Q tile
                pltpu.VMEM((tq, 1), jnp.float32),    # running row max
                pltpu.VMEM((tq, 1), jnp.float32),    # running denominator
                pltpu.VMEM((tq, D), jnp.float32),    # output accumulator
            ]),
        compiler_params=pltpu.CompilerParams(
            dimension_semantics=("parallel", "parallel", "arbitrary"),
            vmem_limit_bytes=budget),
    )(query, k_proj, v_proj, bias, wq_s, bq_s)

    if S_q_pad != S_q:
        out = out[:, :S_q, :]
    return out


# ---------------------------------------------------------------------------
# Pure-JAX reference (f32 everywhere) for correctness checking.
# ---------------------------------------------------------------------------
def reference_forward(query, key, value, mask, wq, bq, wk, bk, wv, bv):
    Q = query @ wq + bq
    K = key @ wk + bk
    V = value @ wv + bv
    D = Q.shape[-1]
    scores = jnp.einsum("bqd,bkd->bqk", Q, K) / math.sqrt(D)
    if mask is not None:
        scores = jnp.where(mask[:, None, :] == 0, -1e9, scores)
    att = jax.nn.softmax(scores, axis=-1)
    return jnp.einsum("bqk,bkd->bqd", att, V)


if __name__ == "__main__":
    # Small shapes consistent with the module:
    # hidden_size=32, num_attention_heads=4 -> attention_head_size D=8
    B, S, H = 2, 8, 32
    D = 8

    key0 = jax.random.PRNGKey(0)
    kq, kk, kv, kwq, kwk, kwv, kbq, kbk, kbv, kmask = jax.random.split(key0, 10)

    query = jax.random.normal(kq, (B, S, H), dtype=jnp.float32)
    key_ = jax.random.normal(kk, (B, S, H), dtype=jnp.float32)
    value = jax.random.normal(kv, (B, S, H), dtype=jnp.float32)

    # Deterministic parameter init (torch Linear: W [D, H], b [D]); stored [H, D] / [1, D].
    bound = 1.0 / math.sqrt(H)
    wq = jax.random.uniform(kwq, (H, D), jnp.float32, -bound, bound)
    wk = jax.random.uniform(kwk, (H, D), jnp.float32, -bound, bound)
    wv = jax.random.uniform(kwv, (H, D), jnp.float32, -bound, bound)
    bq = jax.random.uniform(kbq, (1, D), jnp.float32, -bound, bound)
    bk = jax.random.uniform(kbk, (1, D), jnp.float32, -bound, bound)
    bv = jax.random.uniform(kbv, (1, D), jnp.float32, -bound, bound)

    # Padding mask over keys: 1 = keep, 0 = masked out.
    mask = (jax.random.uniform(kmask, (B, S)) > 0.2).astype(jnp.int32)
    # Ensure at least one valid key per row so softmax is well-defined.
    mask = mask.at[:, 0].set(1)

    out = attention_forward(query, key_, value, mask, wq, bq, wk, bk, wv, bv)
    out = jax.block_until_ready(out)

    ref = reference_forward(query, key_, value, mask, wq, bq, wk, bk, wv, bv)
    assert out.shape == (B, S, D)
    # bf16 MXU operands (f32 accumulation) -> small drift vs the f32 reference.
    assert jnp.allclose(out, ref, atol=2e-2, rtol=2e-2), "mismatch vs reference"

    print("KERNEL_OK")
</pallas_src>

<mosaic_0001>
module attributes {stable_mosaic.version = 11 : i64} {
  func.func @_kv_projection_kernel(%arg0: i32, %arg1: i32, %arg2: memref<1x8x32xf32, #tpu.memory_space<vmem>>, %arg3: memref<1x8x32xf32, #tpu.memory_space<vmem>>, %arg4: memref<32x8xbf16, #tpu.memory_space<vmem>>, %arg5: memref<1x8xf32, #tpu.memory_space<vmem>>, %arg6: memref<32x8xbf16, #tpu.memory_space<vmem>>, %arg7: memref<1x8xf32, #tpu.memory_space<vmem>>, %arg8: memref<1x8x8xbf16, #tpu.memory_space<vmem>>, %arg9: memref<1x8x8xbf16, #tpu.memory_space<vmem>>) attributes {dimension_semantics = [#tpu.dimension_semantics<parallel>, #tpu.dimension_semantics<parallel>], iteration_bounds = array<i64: 2, 1>, scalar_prefetch = 0 : i64, scratch_operands = 0 : i64, tpu.core_type = #tpu.core_type<tc>, window_params = [{transform_indices = @transform_0, window_bounds = array<i64: 1, 8, 32>}, {transform_indices = @transform_1, window_bounds = array<i64: 1, 8, 32>}, {pipeline_mode = #tpu.pipeline_mode<synchronous>, transform_indices = @transform_2, window_bounds = array<i64: 32, 8>}, {pipeline_mode = #tpu.pipeline_mode<synchronous>, transform_indices = @transform_3, window_bounds = array<i64: 1, 8>}, {pipeline_mode = #tpu.pipeline_mode<synchronous>, transform_indices = @transform_4, window_bounds = array<i64: 32, 8>}, {pipeline_mode = #tpu.pipeline_mode<synchronous>, transform_indices = @transform_5, window_bounds = array<i64: 1, 8>}, {transform_indices = @transform_6, window_bounds = array<i64: 1, 8, 8>}, {transform_indices = @transform_7, window_bounds = array<i64: 1, 8, 8>}]} {
    %c0 = arith.constant 0 : index
    %c0_0 = arith.constant 0 : index
    %c0_1 = arith.constant 0 : index
    %0 = vector.load %arg2[%c0, %c0_0, %c0_1] : memref<1x8x32xf32, #tpu.memory_space<vmem>>, vector<1x8x32xf32>
    %1 = vector.shape_cast %0 : vector<1x8x32xf32> to vector<8x32xf32>
    %2 = arith.truncf %1 : vector<8x32xf32> to vector<8x32xbf16>
    %c0_2 = arith.constant 0 : index
    %c0_3 = arith.constant 0 : index
    %c0_4 = arith.constant 0 : index
    %3 = vector.load %arg3[%c0_2, %c0_3, %c0_4] : memref<1x8x32xf32, #tpu.memory_space<vmem>>, vector<1x8x32xf32>
    %4 = vector.shape_cast %3 : vector<1x8x32xf32> to vector<8x32xf32>
    %5 = arith.truncf %4 : vector<8x32xf32> to vector<8x32xbf16>
    %c0_5 = arith.constant 0 : index
    %c0_6 = arith.constant 0 : index
    %6 = vector.load %arg4[%c0_5, %c0_6] : memref<32x8xbf16, #tpu.memory_space<vmem>>, vector<32x8xbf16>
    %cst = arith.constant dense<0.000000e+00> : vector<8x8xf32>
    %7 = tpu.matmul %2, %6, %cst {dimension_numbers = #tpu.dot_dimension_numbers<[1], [0], [0], [1], [0, 0, 1, 1], [], []>} : vector<8x32xbf16>, vector<32x8xbf16>, vector<8x8xf32> -> vector<8x8xf32>
    %c0_7 = arith.constant 0 : index
    %c0_8 = arith.constant 0 : index
    %8 = vector.load %arg5[%c0_7, %c0_8] : memref<1x8xf32, #tpu.memory_space<vmem>>, vector<1x8xf32>
    %9 = vector.broadcast %8 : vector<1x8xf32> to vector<8x8xf32>
    %10 = arith.addf %7, %9 : vector<8x8xf32>
    %11 = arith.truncf %10 : vector<8x8xf32> to vector<8x8xbf16>
    %c0_9 = arith.constant 0 : index
    %c0_10 = arith.constant 0 : index
    %c0_11 = arith.constant 0 : index
    %12 = vector.load %arg8[%c0_9, %c0_10, %c0_11] : memref<1x8x8xbf16, #tpu.memory_space<vmem>>, vector<1x8x8xbf16>
    %13 = vector.shape_cast %12 : vector<1x8x8xbf16> to vector<8x8xbf16>
    %14 = vector.shape_cast %11 : vector<8x8xbf16> to vector<1x8x8xbf16>
    tpu.vector_store %arg8[%c0_9, %c0_10, %c0_11], %14 {strides = array<i32>} : memref<1x8x8xbf16, #tpu.memory_space<vmem>>, vector<1x8x8xbf16>,
    %c0_12 = arith.constant 0 : index
    %c0_13 = arith.constant 0 : index
    %15 = vector.load %arg6[%c0_12, %c0_13] : memref<32x8xbf16, #tpu.memory_space<vmem>>, vector<32x8xbf16>
    %cst_14 = arith.constant dense<0.000000e+00> : vector<8x8xf32>
    %16 = tpu.matmul %5, %15, %cst_14 {dimension_numbers = #tpu.dot_dimension_numbers<[1], [0], [0], [1], [0, 0, 1, 1], [], []>} : vector<8x32xbf16>, vector<32x8xbf16>, vector<8x8xf32> -> vector<8x8xf32>
    %c0_15 = arith.constant 0 : index
    %c0_16 = arith.constant 0 : index
    %17 = vector.load %arg7[%c0_15, %c0_16] : memref<1x8xf32, #tpu.memory_space<vmem>>, vector<1x8xf32>
    %18 = vector.broadcast %17 : vector<1x8xf32> to vector<8x8xf32>
    %19 = arith.addf %16, %18 : vector<8x8xf32>
    %20 = arith.truncf %19 : vector<8x8xf32> to vector<8x8xbf16>
    %c0_17 = arith.constant 0 : index
    %c0_18 = arith.constant 0 : index
    %c0_19 = arith.constant 0 : index
    %21 = vector.load %arg9[%c0_17, %c0_18, %c0_19] : memref<1x8x8xbf16, #tpu.memory_space<vmem>>, vector<1x8x8xbf16>
    %22 = vector.shape_cast %21 : vector<1x8x8xbf16> to vector<8x8xbf16>
    %23 = vector.shape_cast %20 : vector<8x8xbf16> to vector<1x8x8xbf16>
    tpu.vector_store %arg9[%c0_17, %c0_18, %c0_19], %23 {strides = array<i32>} : memref<1x8x8xbf16, #tpu.memory_space<vmem>>, vector<1x8x8xbf16>,
    return
  }
  func.func @transform_0(%arg0: i32, %arg1: i32) -> (i32, i32, i32) {
    %c0_i32 = arith.constant 0 : i32
    %c0_i32_0 = arith.constant 0 : i32
    return %arg0, %arg1, %c0_i32 : i32, i32, i32
  }
  func.func @transform_1(%arg0: i32, %arg1: i32) -> (i32, i32, i32) {
    %c0_i32 = arith.constant 0 : i32
    %c0_i32_0 = arith.constant 0 : i32
    return %arg0, %arg1, %c0_i32 : i32, i32, i32
  }
  func.func @transform_2(%arg0: i32, %arg1: i32) -> (i32, i32) {
    %c0_i32 = arith.constant 0 : i32
    %c0_i32_0 = arith.constant 0 : i32
    %c0_i32_1 = arith.constant 0 : i32
    return %c0_i32, %c0_i32_0 : i32, i32
  }
  func.func @transform_3(%arg0: i32, %arg1: i32) -> (i32, i32) {
    %c0_i32 = arith.constant 0 : i32
    %c0_i32_0 = arith.constant 0 : i32
    %c0_i32_1 = arith.constant 0 : i32
    return %c0_i32, %c0_i32_0 : i32, i32
  }
  func.func @transform_4(%arg0: i32, %arg1: i32) -> (i32, i32) {
    %c0_i32 = arith.constant 0 : i32
    %c0_i32_0 = arith.constant 0 : i32
    %c0_i32_1 = arith.constant 0 : i32
    return %c0_i32, %c0_i32_0 : i32, i32
  }
  func.func @transform_5(%arg0: i32, %arg1: i32) -> (i32, i32) {
    %c0_i32 = arith.constant 0 : i32
    %c0_i32_0 = arith.constant 0 : i32
    %c0_i32_1 = arith.constant 0 : i32
    return %c0_i32, %c0_i32_0 : i32, i32
  }
  func.func @transform_6(%arg0: i32, %arg1: i32) -> (i32, i32, i32) {
    %c0_i32 = arith.constant 0 : i32
    %c0_i32_0 = arith.constant 0 : i32
    return %arg0, %arg1, %c0_i32 : i32, i32, i32
  }
  func.func @transform_7(%arg0: i32, %arg1: i32) -> (i32, i32, i32) {
    %c0_i32 = arith.constant 0 : i32
    %c0_i32_0 = arith.constant 0 : i32
    return %arg0, %arg1, %c0_i32 : i32, i32, i32
  }
}

</mosaic_0001>

<llo_original>
// kernel: tpu_custom_call.1
$region0: #{tpu_custom_call.1}
  #allocation0 [shape = 'u32[]', space=smem, size = 0x4, offset = 0x4, fixed_abs, tag = 'smem constant byte address 0x4 - core index']
  #allocation1 [shape = 'u32[144,128]{1,0:T(1,128)}', space=vmem, size = 0x12000, scoped, tag = 'internal scratch']
  %s0 = inlined_call_operand.vmem [shape: f32[2,8,32], index: 0, kind: input, shape index: {}]
  %s1 = inlined_call_operand.vmem [shape: f32[2,8,32], index: 1, kind: input, shape index: {}]
  %s2 = inlined_call_operand.vmem [shape: bf16[32,8], index: 2, kind: input, shape index: {}]
  %s3 = inlined_call_operand.vmem [shape: f32[1,8], index: 3, kind: input, shape index: {}]
  %s4 = inlined_call_operand.vmem [shape: bf16[32,8], index: 4, kind: input, shape index: {}]
  %s5 = inlined_call_operand.vmem [shape: f32[1,8], index: 5, kind: input, shape index: {}]
  %s6 = inlined_call_operand.hbm [shape: bf16[2,8,8], index: 6, kind: output, shape index: {0}]
  %s7 = inlined_call_operand.hbm [shape: bf16[2,8,8], index: 7, kind: output, shape index: {1}]
  %8 = xla_tuple %s6, %s7
  %s9 = sld [smem:[#allocation0]]
  $region65: #{tpu_custom_call.1} parent=0
    _
  %s11 = ssub.s32 1, %s9
  %s12 = scalar_select 0, %s11, %s9
  $region1: #{tpu_custom_call.1} parent=0
    #allocation2 [shape = 'u8[4096]{0}', space=vmem, size = 0x1000, scoped, tag = 'output window, operand 0']
    #allocation3 [shape = 's32[2]{0}', space=sflag, size = 0x8, scoped, tag = 'scoped memory for tpu_custom_call.1']
    #allocation4 [shape = 'u8[4096]{0}', space=vmem, size = 0x1000, scoped, tag = 'output window, operand 1']
    #allocation5 [shape = 's32[2]{0}', space=sflag, size = 0x8, scoped, tag = 'scoped memory for tpu_custom_call.1']
    %13 = vsyncpa [#allocation3], 0
    %s14 = scalar_lea.sflag [#allocation3], 1
    %15 = vsyncpa %s14, 0
    %16 = vsyncpa [#allocation5], 0
    %s17 = scalar_lea.sflag [#allocation5], 1
    %18 = vsyncpa %s17, 0
    loop: start=0, step=1, limit=4
    $region2: #{tpu_custom_call.1} parent=1 // loop_pre_header
      _
    $region3: #{tpu_custom_call.1} parent=1 // loop_header
      %s20 = sphi 0, %s24
      %p21 = scmp.ge.s32.totalorder %s20, 4
      %s27 = sphi 0, %s39
      %s28 = sphi 0, %s35
      %s29 = sphi 0, %s27
      %s30 = sphi 0, %s28
      %s31 = sphi 0, %s29
      %s32 = sphi 0, %s30
      %s44 = sphi 0, %s46
      %s47 = sphi 0, %s44
      %s48 = sphi 0, %s47
      %s64 = sphi 0, %s48
      %s72 = sphi 0, %s74
      %s75 = sphi 0, %s72
      %s76 = sphi 0, %s75
      %s92 = sphi 0, %s76
      %s96 = sphi 0, %s96
      %s98 = sphi 0, %s96
      %s99 = sphi 0, %s98
      %s113 = sphi 0, %s99
      %s117 = sphi 0, %s117
      %s119 = sphi 0, %s117
      %s120 = sphi 0, %s119
      %s134 = sphi 0, %s120
      %s138 = sphi 0, %s138
      %s140 = sphi 0, %s138
      %s141 = sphi 0, %s140
      %s155 = sphi 0, %s141
      %s159 = sphi 0, %s159
      %s161 = sphi 0, %s159
      %s162 = sphi 0, %s161
      %s176 = sphi 0, %s162
      %s184 = sphi 0, %s186
      %s187 = sphi 0, %s184
      %s188 = sphi 0, %s187
      %s204 = sphi 0, %s188
      %s212 = sphi 0, %s214
      %s215 = sphi 0, %s212
      %s216 = sphi 0, %s215
      %s232 = sphi 0, %s216
    $region4: #{tpu_custom_call.1} parent=1 // loop_header_branch
      %23 = sbr.rel (%p21) target = $region8
    $region5: #{tpu_custom_call.1} parent=1 // loop_body
      %s25 = ssub.s32 %s20, 1
      %s26 = ssub.s32 %s20, 2
      %s33 = sadd.s32 1, %s28
      %p34 = scmp.ge.s32.totalorder %s33, 1
      %s35 = scalar_select %p34, 0, %s33
      %s36 = sadd.s32 1, %s27
      %s37 = scalar_select %p34, %s36, %s27
      %p38 = scmp.ge.s32.totalorder %s37, 2
      %s39 = scalar_select %p38, 0, %s37
      %s40 = ssub.s32 %s27, %s39
      %s41 = ssub.s32 %s28, %s35
      %s42 = sor.u32 %s40, %s41
      %p43 = scmp.eq.s32.totalorder %s42, 0
      %s45 = sadd.s32 %s44, 1
      %s46 = scalar_select %p43, %s44, %s45
      %p49 = pneg %p43
      %p50 = scmp.eq.s32.totalorder %s20, 1
      %p51 = por %p49, %p50
      %p52 = scmp.ne.s32.totalorder %s44, %s47
      %p53 = scmp.eq.s32.totalorder %s20, 0
      %p54 = por %p52, %p53
      %p55 = scmp.ne.s32.totalorder %s44, %s47
      %p56 = scmp.eq.s32.totalorder %s25, 1
      %p57 = por %p55, %p56
      %p58 = scmp.ne.s32.totalorder %s47, %s48
      %p59 = scmp.eq.s32.totalorder %s25, 0
      %p60 = por %p58, %p59
      %p61 = scmp.ne.s32.totalorder %s47, %s48
      %p62 = scmp.eq.s32.totalorder %s26, 1
      %p63 = por %p61, %p62
      %p65 = scmp.ne.s32.totalorder %s48, %s64
      %p66 = scmp.eq.s32.totalorder %s26, 0
      %p67 = por %p65, %p66
      %s68 = ssub.s32 %s27, %s39
      %s69 = ssub.s32 %s28, %s35
      %s70 = sor.u32 %s68, %s69
      %p71 = scmp.eq.s32.totalorder %s70, 0
      %s73 = sadd.s32 %s72, 1
      %s74 = scalar_select %p71, %s72, %s73
      %p77 = pneg %p71
      %p78 = scmp.eq.s32.totalorder %s20, 1
      %p79 = por %p77, %p78
      %p80 = scmp.ne.s32.totalorder %s72, %s75
      %p81 = scmp.eq.s32.totalorder %s20, 0
      %p82 = por %p80, %p81
      %p83 = scmp.ne.s32.totalorder %s72, %s75
      %p84 = scmp.eq.s32.totalorder %s25, 1
      %p85 = por %p83, %p84
      %p86 = scmp.ne.s32.totalorder %s75, %s76
      %p87 = scmp.eq.s32.totalorder %s25, 0
      %p88 = por %p86, %p87
      %p89 = scmp.ne.s32.totalorder %s75, %s76
      %p90 = scmp.eq.s32.totalorder %s26, 1
      %p91 = por %p89, %p90
      %p93 = scmp.ne.s32.totalorder %s76, %s92
      %p94 = scmp.eq.s32.totalorder %s26, 0
      %p95 = por %p93, %p94
      %s97 = sadd.s32 %s96, 1
      %p100 = scmp.eq.s32.totalorder %s20, 1
      %p101 = scmp.ne.s32.totalorder %s96, %s98
      %p102 = scmp.eq.s32.totalorder %s20, 0
      %p103 = por %p101, %p102
      %p104 = scmp.ne.s32.totalorder %s96, %s98
      %p105 = scmp.eq.s32.totalorder %s25, 1
      %p106 = por %p104, %p105
      %p107 = scmp.ne.s32.totalorder %s98, %s99
      %p108 = scmp.eq.s32.totalorder %s25, 0
      %p109 = por %p107, %p108
      %p110 = scmp.ne.s32.totalorder %s98, %s99
      %p111 = scmp.eq.s32.totalorder %s26, 1
      %p112 = por %p110, %p111
      %p114 = scmp.ne.s32.totalorder %s99, %s113
      %p115 = scmp.eq.s32.totalorder %s26, 0
      %p116 = por %p114, %p115
      %s118 = sadd.s32 %s117, 1
      %p121 = scmp.eq.s32.totalorder %s20, 1
      %p122 = scmp.ne.s32.totalorder %s117, %s119
      %p123 = scmp.eq.s32.totalorder %s20, 0
      %p124 = por %p122, %p123
      %p125 = scmp.ne.s32.totalorder %s117, %s119
      %p126 = scmp.eq.s32.totalorder %s25, 1
      %p127 = por %p125, %p126
      %p128 = scmp.ne.s32.totalorder %s119, %s120
      %p129 = scmp.eq.s32.totalorder %s25, 0
      %p130 = por %p128, %p129
      %p131 = scmp.ne.s32.totalorder %s119, %s120
      %p132 = scmp.eq.s32.totalorder %s26, 1
      %p133 = por %p131, %p132
      %p135 = scmp.ne.s32.totalorder %s120, %s134
      %p136 = scmp.eq.s32.totalorder %s26, 0
      %p137 = por %p135, %p136
      %s139 = sadd.s32 %s138, 1
      %p142 = scmp.eq.s32.totalorder %s20, 1
      %p143 = scmp.ne.s32.totalorder %s138, %s140
      %p144 = scmp.eq.s32.totalorder %s20, 0
      %p145 = por %p143, %p144
      %p146 = scmp.ne.s32.totalorder %s138, %s140
      %p147 = scmp.eq.s32.totalorder %s25, 1
      %p148 = por %p146, %p147
      %p149 = scmp.ne.s32.totalorder %s140, %s141
      %p150 = scmp.eq.s32.totalorder %s25, 0
      %p151 = por %p149, %p150
      %p152 = scmp.ne.s32.totalorder %s140, %s141
      %p153 = scmp.eq.s32.totalorder %s26, 1
      %p154 = por %p152, %p153
      %p156 = scmp.ne.s32.totalorder %s141, %s155
      %p157 = scmp.eq.s32.totalorder %s26, 0
      %p158 = por %p156, %p157
      %s160 = sadd.s32 %s159, 1
      %p163 = scmp.eq.s32.totalorder %s20, 1
      %p164 = scmp.ne.s32.totalorder %s159, %s161
      %p165 = scmp.eq.s32.totalorder %s20, 0
      %p166 = por %p164, %p165
      %p167 = scmp.ne.s32.totalorder %s159, %s161
      %p168 = scmp.eq.s32.totalorder %s25, 1
      %p169 = por %p167, %p168
      %p170 = scmp.ne.s32.totalorder %s161, %s162
      %p171 = scmp.eq.s32.totalorder %s25, 0
      %p172 = por %p170, %p171
      %p173 = scmp.ne.s32.totalorder %s161, %s162
      %p174 = scmp.eq.s32.totalorder %s26, 1
      %p175 = por %p173, %p174
      %p177 = scmp.ne.s32.totalorder %s162, %s176
      %p178 = scmp.eq.s32.totalorder %s26, 0
      %p179 = por %p177, %p178
      %s180 = ssub.s32 %s27, %s39
      %s181 = ssub.s32 %s28, %s35
      %s182 = sor.u32 %s180, %s181
      %p183 = scmp.eq.s32.totalorder %s182, 0
      %s185 = sadd.s32 %s184, 1
      %s186 = scalar_select %p183, %s184, %s185
      %p189 = pneg %p183
      %p190 = scmp.eq.s32.totalorder %s20, 1
      %p191 = por %p189, %p190
      %p192 = scmp.ne.s32.totalorder %s184, %s187
      %p193 = scmp.eq.s32.totalorder %s20, 0
      %p194 = por %p192, %p193
      %p195 = scmp.ne.s32.totalorder %s184, %s187
      %p196 = scmp.eq.s32.totalorder %s25, 1
      %p197 = por %p195, %p196
      %p198 = scmp.ne.s32.totalorder %s187, %s188
      %p199 = scmp.eq.s32.totalorder %s25, 0
      %p200 = por %p198, %p199
      %p201 = scmp.ne.s32.totalorder %s187, %s188
      %p202 = scmp.eq.s32.totalorder %s26, 1
      %p203 = por %p201, %p202
      %p205 = scmp.ne.s32.totalorder %s188, %s204
      %p206 = scmp.eq.s32.totalorder %s26, 0
      %p207 = por %p205, %p206
      %s208 = ssub.s32 %s27, %s39
      %s209 = ssub.s32 %s28, %s35
      %s210 = sor.u32 %s208, %s209
      %p211 = scmp.eq.s32.totalorder %s210, 0
      %s213 = sadd.s32 %s212, 1
      %s214 = scalar_select %p211, %s212, %s213
      %p217 = pneg %p211
      %p218 = scmp.eq.s32.totalorder %s20, 1
      %p219 = por %p217, %p218
      %p220 = scmp.ne.s32.totalorder %s212, %s215
      %p221 = scmp.eq.s32.totalorder %s20, 0
      %p222 = por %p220, %p221
      %p223 = scmp.ne.s32.totalorder %s212, %s215
      %p224 = scmp.eq.s32.totalorder %s25, 1
      %p225 = por %p223, %p224
      %p226 = scmp.ne.s32.totalorder %s215, %s216
      %p227 = scmp.eq.s32.totalorder %s25, 0
      %p228 = por %p226, %p227
      %p229 = scmp.ne.s32.totalorder %s215, %s216
      %p230 = scmp.eq.s32.totalorder %s26, 1
      %p231 = por %p229, %p230
      %p233 = scmp.ne.s32.totalorder %s216, %s232
      %p234 = scmp.eq.s32.totalorder %s26, 0
      %p235 = por %p233, %p234
      %p236 = scmp.le.s32.totalorder 1, %s20
      %p237 = scmp.lt.s32.totalorder %s20, 3
      %p238 = pnand %p236, %p237
      %p239 = pneg %p238
      // Predicated region
      $region9: #{tpu_custom_call.1} parent=5 // pred_check
        _
      $region10: #{tpu_custom_call.1} parent=5 // pred_check_branch
        %241 = sbr.rel (%p238) target = $region12
      $region11: #{tpu_custom_call.1} parent=5 // pred_region
        %s242 = ssub.s32 %s20, 1
        // Predicated region
        $region13: #{tpu_custom_call.1} parent=11 // pred_check
          %p243 = pneg %p109
        $region14: #{tpu_custom_call.1} parent=11 // pred_check_branch
          %245 = sbr.rel (%p243) target = $region16
        $region15: #{tpu_custom_call.1} parent=11 // pred_region
          _
        $region16: #{tpu_custom_call.1} parent=11 // pred_fallthru
          _
        // Predicated region
        $region17: #{tpu_custom_call.1} parent=11 // pred_check
          %p246 = pneg %p130
        $region18: #{tpu_custom_call.1} parent=11 // pred_check_branch
          %248 = sbr.rel (%p246) target = $region20
        $region19: #{tpu_custom_call.1} parent=11 // pred_region
          _
        $region20: #{tpu_custom_call.1} parent=11 // pred_fallthru
          _
        // Predicated region
        $region21: #{tpu_custom_call.1} parent=11 // pred_check
          %p249 = pneg %p151
        $region22: #{tpu_custom_call.1} parent=11 // pred_check_branch
          %251 = sbr.rel (%p249) target = $region24
        $region23: #{tpu_custom_call.1} parent=11 // pred_region
          _
        $region24: #{tpu_custom_call.1} parent=11 // pred_fallthru
          _
        // Predicated region
        $region25: #{tpu_custom_call.1} parent=11 // pred_check
          %p252 = pneg %p172
        $region26: #{tpu_custom_call.1} parent=11 // pred_check_branch
          %254 = sbr.rel (%p252) target = $region28
        $region27: #{tpu_custom_call.1} parent=11 // pred_region
          _
        $region28: #{tpu_custom_call.1} parent=11 // pred_fallthru
          _
      $region12: #{tpu_custom_call.1} parent=5 // pred_fallthru
        _
      %p255 = scmp.lt.s32.totalorder %s20, 2
      // Predicated region
      $region29: #{tpu_custom_call.1} parent=5 // pred_check
        %p256 = pneg %p255
      $region30: #{tpu_custom_call.1} parent=5 // pred_check_branch
        %258 = sbr.rel (%p256) target = $region32
      $region31: #{tpu_custom_call.1} parent=5 // pred_region
        // Predicated region
        $region33: #{tpu_custom_call.1} parent=31 // pred_check
          %p259 = pneg %p54
        $region34: #{tpu_custom_call.1} parent=31 // pred_check_branch
          %261 = sbr.rel (%p259) target = $region36
        $region35: #{tpu_custom_call.1} parent=31 // pred_region
          %p262 = scmp.lt.s32.totalorder %s27, 1
          %s263 = scalar_select %p262, %s27, 1
          %p264 = scmp.lt.s32.totalorder %s28, 0
          %s265 = scalar_select %p264, %s28, 0
          %s266 = sadd.s32 %s265, %s263
          %s267 = smul.addr %s266, 8
          %s268 = scalar_lea.vmem %s0, %s267
        $region36: #{tpu_custom_call.1} parent=31 // pred_fallthru
          _
        // Predicated region
        $region37: #{tpu_custom_call.1} parent=31 // pred_check
          %p269 = pneg %p82
        $region38: #{tpu_custom_call.1} parent=31 // pred_check_branch
          %271 = sbr.rel (%p269) target = $region40
        $region39: #{tpu_custom_call.1} parent=31 // pred_region
          %p272 = scmp.lt.s32.totalorder %s27, 1
          %s273 = scalar_select %p272, %s27, 1
          %p274 = scmp.lt.s32.totalorder %s28, 0
          %s275 = scalar_select %p274, %s28, 0
          %s276 = sadd.s32 %s275, %s273
          %s277 = smul.addr %s276, 8
          %s278 = scalar_lea.vmem %s1, %s277
        $region40: #{tpu_custom_call.1} parent=31 // pred_fallthru
          _
      $region32: #{tpu_custom_call.1} parent=5 // pred_fallthru
        _
      %p279 = scmp.le.s32.totalorder 1, %s20
      %p280 = scmp.lt.s32.totalorder %s20, 3
      %p281 = pnand %p279, %p280
      %p282 = pneg %p281
      // Predicated region
      $region41: #{tpu_custom_call.1} parent=5 // pred_check
        _
      $region42: #{tpu_custom_call.1} parent=5 // pred_check_branch
        %284 = sbr.rel (%p281) target = $region44
      $region43: #{tpu_custom_call.1} parent=5 // pred_region
        %s285 = ssub.s32 %s20, 1
        %p286 = scmp.lt.s32.totalorder %s29, 1
        %s287 = scalar_select %p286, %s29, 1
        %p288 = scmp.lt.s32.totalorder %s30, 0
        %s289 = scalar_select %p288, %s30, 0
        %s290 = sadd.s32 %s289, %s287
        %s291 = smul.addr %s290, 8
        %s292 = scalar_lea.vmem %s0, %s291
        %p293 = pneg %p60
        %p294 = pneg %p57
        %p295 = scmp.lt.s32.totalorder %s29, 1
        %s296 = scalar_select %p295, %s29, 1
        %p297 = scmp.lt.s32.totalorder %s30, 0
        %s298 = scalar_select %p297, %s30, 0
        %s299 = sadd.s32 %s298, %s296
        %s300 = smul.addr %s299, 8
        %s301 = scalar_lea.vmem %s1, %s300
        %p302 = pneg %p88
        %p303 = pneg %p85
        %p304 = pneg %p109
        %p305 = pneg %p106
        %p306 = pneg %p130
        %p307 = pneg %p127
        %p308 = pneg %p151
        %p309 = pneg %p148
        %p310 = pneg %p172
        %p311 = pneg %p169
        %p312 = pneg %p200
        %p313 = pneg %p197
        %s314 = sand.u32 %s187, 1
        %s315 = scalar_lea.sflag [#allocation3], %s314
        %s316 = sand.u32 %s187, 1
        %s317 = smul.addr %s316, 4
        %s318 = scalar_lea.vmem [#allocation2], %s317
        %p319 = pneg %p228
        %p320 = pneg %p225
        %s321 = sand.u32 %s215, 1
        %s322 = scalar_lea.sflag [#allocation5], %s321
        %s323 = sand.u32 %s215, 1
        %s324 = smul.addr %s323, 4
        %s325 = scalar_lea.vmem [#allocation4], %s324
        %p326 = scmp.lt.s32.totalorder %s29, 1
        %s327 = scalar_select %p326, %s29, 1
        %p328 = scmp.lt.s32.totalorder %s30, 0
        %s329 = scalar_select %p328, %s30, 0
        %s330 = sadd.s32 %s329, %s327
        %s331 = smul.addr %s330, 8
        %s332 = scalar_lea.vmem %s0, %s331
        %p333 = scmp.lt.s32.totalorder %s29, 1
        %s334 = scalar_select %p333, %s29, 1
        %p335 = scmp.lt.s32.totalorder %s30, 0
        %s336 = scalar_select %p335, %s30, 0
        %s337 = sadd.s32 %s336, %s334
        %s338 = smul.addr %s337, 8
        %s339 = scalar_lea.vmem %s1, %s338
        %v341 = vld [vmem:[%s332] sm:$0xff]
        %v342 = vpack.c.bf16 %v341, %v341
        %v343 = vld [vmem:[%s339] sm:$0xff]
        %v344 = vpack.c.bf16 %v343, %v343
        %v345 = vld [vmem:[%s2] sm:$0xf]
        %v346 = vld [vmem:[%s2 + $0x4] sm:$0xf]
        %v347 = vld [vmem:[%s2 + $0x8] sm:$0xf]
        %v348 = vld [vmem:[%s2 + $0xc] sm:$0xf]
        %v349 = vld [vmem:[%s3] sm:$0x1]
        %v351 = vlaneseq
        %v352 = vshrl.u32 %v351, 7
        %v353 = vsub.s32 0, %v352
        %v354 = vrot.slane %v349, %v353
        %v360 = vunpack.c.l.b16 %v345
        %v361 = vunpack.c.l.b16 %v346
        %v362 = vunpack.c.l.b16 %v347
        %v363 = vunpack.c.l.b16 %v348
        %v364 = vpack.c.b16 %v361, %v360
        %v365 = vpack.c.b16 %v363, %v362
        %vm368 = vcmask 261120
        %v370 = vsel %vm368, %v342, 0
        %372 = vmatprep.subr.bf16.mxu0 0
        %373 = vmatpush1.bf16.msra.mxu0 %v364
        %374 = vmatprep.subr.bf16.mxu0 0
        %375 = vmatpush1.bf16.msra.mxu0 %v365
        %376 = vmatprep.subr.bf16.mxu0 0
        %377 = vmatpush1.bf16.msra.mxu0 0
        %378 = vmatprep.subr.bf16.mxu0 0
        %379 = vmatpush1.bf16.msra.mxu0 0
        %380 = vmatprep.subr.bf16.mxu0 0
        %381 = vmatpush1.bf16.msra.mxu0 0
        %382 = vmatprep.subr.bf16.mxu0 0
        %383 = vmatpush1.bf16.msra.mxu0 0
        %384 = vmatprep.subr.bf16.mxu0 0
        %385 = vmatpush1.bf16.msra.mxu0 0
        %386 = vmatprep.subr.bf16.mxu0 0
        %387 = vmatpush1.bf16.msra.mxu0 0
        %388 = vmatprep.subr.bf16.mxu0 0
        %389 = vmatpush1.bf16.msra.mxu0 0
        %390 = vmatprep.subr.bf16.mxu0 0
        %391 = vmatpush1.bf16.msra.mxu0 0
        %392 = vmatprep.subr.bf16.mxu0 0
        %393 = vmatpush1.bf16.msra.mxu0 0
        %394 = vmatprep.subr.bf16.mxu0 0
        %395 = vmatpush1.bf16.msra.mxu0 0
        %396 = vmatprep.subr.bf16.mxu0 0
        %397 = vmatpush1.bf16.msra.mxu0 0
        %398 = vmatprep.subr.bf16.mxu0 0
        %399 = vmatpush1.bf16.msra.mxu0 0
        %400 = vmatprep.subr.bf16.mxu0 0
        %401 = vmatpush1.bf16.msra.mxu0 0
        %402 = vmatprep.subr.bf16.mxu0 0
        %403 = vmatpush1.bf16.msra.mxu0 0
        %404 = vmatprep.mubr.bf16.mxu0 0
        %405 = vmatmul.mubr.bf16.gmra.mrb[0].mxu0 %v370
        %v406 = vpop.f32.mrb[0].mxu0
        %v407 = vadd.f32 %v354, %v406
        %v408 = vpop.f32.mrb[0].mxu0
        %v409 = vpop.f32.mrb[0].mxu0
        %v410 = vpop.f32.mrb[0].mxu0
        %411 = vdwg.mxu0
        %v412 = vpack.c.bf16 %v407, %v407
        %vm413 = vcmask 60416
        %414 = vst.msk [vmem:[%s318] sm:$0xf] %vm413, %v412
        %v415 = vld [vmem:[%s4] sm:$0xf]
        %v416 = vld [vmem:[%s4 + $0x4] sm:$0xf]
        %v417 = vld [vmem:[%s4 + $0x8] sm:$0xf]
        %v418 = vld [vmem:[%s4 + $0xc] sm:$0xf]
        %v419 = vld [vmem:[%s5] sm:$0x1]
        %v421 = vlaneseq
        %v422 = vshrl.u32 %v421, 7
        %v423 = vsub.s32 0, %v422
        %v424 = vrot.slane %v419, %v423
        %v430 = vunpack.c.l.b16 %v415
        %v431 = vunpack.c.l.b16 %v416
        %v432 = vunpack.c.l.b16 %v417
        %v433 = vunpack.c.l.b16 %v418
        %v434 = vpack.c.b16 %v431, %v430
        %v435 = vpack.c.b16 %v433, %v432
        %v439 = vsel %vm368, %v344, 0
        %441 = vmatprep.subr.bf16.mxu0 0
        %442 = vmatpush1.bf16.msra.mxu0 %v434
        %443 = vmatprep.subr.bf16.mxu0 0
        %444 = vmatpush1.bf16.msra.mxu0 %v435
        %445 = vmatprep.subr.bf16.mxu0 0
        %446 = vmatpush1.bf16.msra.mxu0 0
        %447 = vmatprep.subr.bf16.mxu0 0
        %448 = vmatpush1.bf16.msra.mxu0 0
        %449 = vmatprep.subr.bf16.mxu0 0
        %450 = vmatpush1.bf16.msra.mxu0 0
        %451 = vmatprep.subr.bf16.mxu0 0
        %452 = vmatpush1.bf16.msra.mxu0 0
        %453 = vmatprep.subr.bf16.mxu0 0
        %454 = vmatpush1.bf16.msra.mxu0 0
        %455 = vmatprep.subr.bf16.mxu0 0
        %456 = vmatpush1.bf16.msra.mxu0 0
        %457 = vmatprep.subr.bf16.mxu0 0
        %458 = vmatpush1.bf16.msra.mxu0 0
        %459 = vmatprep.subr.bf16.mxu0 0
        %460 = vmatpush1.bf16.msra.mxu0 0
        %461 = vmatprep.subr.bf16.mxu0 0
        %462 = vmatpush1.bf16.msra.mxu0 0
        %463 = vmatprep.subr.bf16.mxu0 0
        %464 = vmatpush1.bf16.msra.mxu0 0
        %465 = vmatprep.subr.bf16.mxu0 0
        %466 = vmatpush1.bf16.msra.mxu0 0
        %467 = vmatprep.subr.bf16.mxu0 0
        %468 = vmatpush1.bf16.msra.mxu0 0
        %469 = vmatprep.subr.bf16.mxu0 0
        %470 = vmatpush1.bf16.msra.mxu0 0
        %471 = vmatprep.subr.bf16.mxu0 0
        %472 = vmatpush1.bf16.msra.mxu0 0
        %473 = vmatprep.mubr.bf16.mxu0 0
        %474 = vmatmul.mubr.bf16.gmra.mrb[0].mxu0 %v439
        %v475 = vpop.f32.mrb[0].mxu0
        %v476 = vadd.f32 %v424, %v475
        %v477 = vpop.f32.mrb[0].mxu0
        %v478 = vpop.f32.mrb[0].mxu0
        %v479 = vpop.f32.mrb[0].mxu0
        %480 = vdwg.mxu0
        %v481 = vpack.c.bf16 %v476, %v476
        %482 = vst.msk [vmem:[%s325] sm:$0xf] %vm413, %v481
        %s483 = sand.u32 %s187, 1
        %s484 = scalar_lea.sflag [#allocation3], %s483
        %s485 = sand.u32 %s187, 1
        %s486 = smul.addr %s485, 4
        %s487 = scalar_lea.vmem [#allocation2], %s486
        %s488 = sand.u32 %s215, 1
        %s489 = scalar_lea.sflag [#allocation5], %s488
        %s490 = sand.u32 %s215, 1
        %s491 = smul.addr %s490, 4
        %s492 = scalar_lea.vmem [#allocation4], %s491
        // Predicated region
        $region45: #{tpu_custom_call.1} parent=43 // pred_check
          %p493 = pneg %p197
        $region46: #{tpu_custom_call.1} parent=43 // pred_check_branch
          %495 = sbr.rel (%p493) target = $region48
        $region47: #{tpu_custom_call.1} parent=43 // pred_region
          %s497 = ssub.s32 64, 64
          %498 = vsyncadd %s484, %s497
          %s499 = sadd.s32 %s30, %s29
          %s500 = smul.addr %s499, 64
          %s501 = scalar_lea.hbm %s6, %s500
          %s503 = sshll.u32 %s487, 4
          %s504 = int_to_ptr.vmem [resolvable:$true] %s503
          %506 = dma.vmem_to_hbm [thread:$0]  %s504, 64, %s501, %s484
        $region48: #{tpu_custom_call.1} parent=43 // pred_fallthru
          _
        // Predicated region
        $region49: #{tpu_custom_call.1} parent=43 // pred_check
          %p507 = pneg %p225
        $region50: #{tpu_custom_call.1} parent=43 // pred_check_branch
          %509 = sbr.rel (%p507) target = $region52
        $region51: #{tpu_custom_call.1} parent=43 // pred_region
          %s511 = ssub.s32 64, 64
          %512 = vsyncadd %s489, %s511
          %s513 = sadd.s32 %s30, %s29
          %s514 = smul.addr %s513, 64
          %s515 = scalar_lea.hbm %s7, %s514
          %s517 = sshll.u32 %s492, 4
          %s518 = int_to_ptr.vmem [resolvable:$true] %s517
          %520 = dma.vmem_to_hbm [thread:$0]  %s518, 64, %s515, %s489
        $region52: #{tpu_custom_call.1} parent=43 // pred_fallthru
          _
      $region44: #{tpu_custom_call.1} parent=5 // pred_fallthru
        _
      %p521 = scmp.le.s32.totalorder 2, %s20
      // Predicated region
      $region53: #{tpu_custom_call.1} parent=5 // pred_check
        %p522 = pneg %p521
      $region54: #{tpu_custom_call.1} parent=5 // pred_check_branch
        %524 = sbr.rel (%p522) target = $region56
      $region55: #{tpu_custom_call.1} parent=5 // pred_region
        %s525 = ssub.s32 %s20, 2
        // Predicated region
        $region57: #{tpu_custom_call.1} parent=55 // pred_check
          %p526 = pneg %p203
        $region58: #{tpu_custom_call.1} parent=55 // pred_check_branch
          %528 = sbr.rel (%p526) target = $region60
        $region59: #{tpu_custom_call.1} parent=55 // pred_region
          %s529 = sand.u32 %s188, 1
          %s530 = scalar_lea.sflag [#allocation3], %s529
          %s531 = sand.u32 %s188, 1
          %s532 = smul.addr %s531, 4
          %s533 = scalar_lea.vmem [#allocation2], %s532
          %534 = dma.done %s530, 64
        $region60: #{tpu_custom_call.1} parent=55 // pred_fallthru
          _
        // Predicated region
        $region61: #{tpu_custom_call.1} parent=55 // pred_check
          %p535 = pneg %p231
        $region62: #{tpu_custom_call.1} parent=55 // pred_check_branch
          %537 = sbr.rel (%p535) target = $region64
        $region63: #{tpu_custom_call.1} parent=55 // pred_region
          %s538 = sand.u32 %s216, 1
          %s539 = scalar_lea.sflag [#allocation5], %s538
          %s540 = sand.u32 %s216, 1
          %s541 = smul.addr %s540, 4
          %s542 = scalar_lea.vmem [#allocation4], %s541
          %543 = dma.done %s539, 64
        $region64: #{tpu_custom_call.1} parent=55 // pred_fallthru
          _
      $region56: #{tpu_custom_call.1} parent=5 // pred_fallthru
        _
    $region6: #{tpu_custom_call.1} parent=1 // loop_footer
      %s24 = sadd.s32 1, %s20
    $region7: #{tpu_custom_call.1} parent=1 // loop_footer_branch
      %19 = sbr.rel target = $region3
    $region8: #{tpu_custom_call.1} parent=1 // loop_exit
      _
    %544 = vsyncpa [#allocation3], 1
    %s545 = scalar_lea.sflag [#allocation3], 1
    %546 = vsyncpa %s545, 1
    %547 = vsyncpa [#allocation5], 1
    %s548 = scalar_lea.sflag [#allocation5], 1
    %549 = vsyncpa %s548, 1

</llo_original>
